<compile_context>
chip_gen: v7x
topology: tpu7x:2x2x1
jax: 0.10.0
libtpu: 0.0.40
codegen_flags: <defaults>
</compile_context>

<pallas_src>
import math
import functools

import jax
import jax.numpy as jnp
from jax.experimental import pallas as pl
from jax.experimental.pallas import tpu as pltpu


def _fusion_kernel(x_ref, o_ref, *, cav, C, inv_sqrt_dim, keep_values):
    # x_ref block: (cav*C, T) -- cav*C rows on the sublane axis, T spatial lanes.
    x0 = x_ref[0:C, :].astype(jnp.float32)                      # (C, T) query (cav 0)

    # score_j[p] = <x0[:, p], xj[:, p]> / sqrt(C); unrolled over the small cav axis.
    xs = [x0]
    score_rows = [jnp.sum(x0 * x0, axis=0, keepdims=True) * inv_sqrt_dim]
    for j in range(1, cav):
        xj = x_ref[j * C:(j + 1) * C, :].astype(jnp.float32)    # (C, T)
        score_rows.append(jnp.sum(x0 * xj, axis=0, keepdims=True) * inv_sqrt_dim)
        if keep_values:
            xs.append(xj)                                       # reuse in context pass

    # Dense (cav, T) softmax over the cav axis (per spatial position).
    if cav == 1:
        scores = score_rows[0]
    else:
        scores = jnp.concatenate(score_rows, axis=0)            # (cav, T)
    m = jnp.max(scores, axis=0, keepdims=True)                  # (1, T)
    e = jnp.exp(scores - m)                                     # (cav, T)
    denom = jnp.sum(e, axis=0, keepdims=True)                   # (1, T)

    # Reciprocal on the EUP (frees VALU slots) + one Newton step for f32 accuracy.
    inv = pl.reciprocal(denom, approx=True)
    inv = inv * (2.0 - denom * inv)
    attn = e * inv                                              # (cav, T)

    # context[c, p] = sum_j attn[j, p] * x[j, c, p]
    out = attn[0:1, :] * x0                                     # (C, T)
    for j in range(1, cav):
        if keep_values:
            xj = xs[j]
        else:
            xj = x_ref[j * C:(j + 1) * C, :].astype(jnp.float32)
        out = out + attn[j:j + 1, :] * xj
    o_ref[...] = out.astype(o_ref.dtype)


def _vmem_budget_and_limit():
    """Generation-aware (tile budget, vmem_limit_bytes)."""
    phys = 64 * 1024 * 1024  # conservative default = v7x per-TC VMEM
    try:
        get_info = getattr(pltpu, "get_tpu_info", None)
        if get_info is not None:
            phys = int(getattr(get_info(), "vmem_capacity_bytes", phys))
    except Exception:
        pass
    if phys >= 128 * 1024 * 1024:
        # v5e / v6e: 128 MiB physical VMEM -> bigger tiles, raised scoped limit.
        return 64 * 1024 * 1024, 96 * 1024 * 1024
    # v7x: 64 MiB physical per TensorCore -> keep the conservative 32 MiB scope.
    return 24 * 1024 * 1024, 32 * 1024 * 1024


def _choose_tile(cav, C, HW, itemsize, vmem_budget):
    """Lane tile (multiple of 128) sized to VMEM; >=2 grid programs when possible."""
    # BlockSpec double-buffers both the (cav*C, tile) input and the (C, tile) output.
    per_lane = 2 * (cav * C + C) * itemsize
    max_units = max(1, min((vmem_budget // per_lane) // 128, 16))   # cap tile at 2048 lanes
    hw_units = pl.cdiv(HW, 128)

    if HW % 128 == 0:
        cap = max_units
        if hw_units >= 2:
            cap = min(cap, hw_units // 2)     # guarantee >=2 programs (v7x megacore)
        cap = max(cap, 1)
        # Largest unit count <= cap dividing hw_units -> every block full, no padding.
        d = 1
        for u in range(cap, 0, -1):
            if hw_units % u == 0:
                d = u
                break
        return d * 128

    # HW not a multiple of 128: let the last block be partial (Pallas masks OOB
    # lanes; the math is lane-local so garbage lanes cannot pollute valid output).
    cap = min(max_units, hw_units)
    if hw_units >= 2:
        cap = min(cap, max(1, hw_units // 2))
    return max(1, cap) * 128


def attention_fusion(x, *, cast_to_bf16=False):
    """x: (cav_num, C, H, W) -> (C, H, W); math in f32, output in x.dtype.

    cast_to_bf16=True halves HBM read traffic (kernel is bandwidth bound) but
    changes numerics vs the f32 reference, so it is off by default.
    """
    cav, C, H, W = x.shape
    HW = H * W

    # Flatten (cav, C) onto one sublane axis -> dense 2-D slab; pure view, no HBM copy.
    x_flat = x.reshape(cav * C, HW)
    if cast_to_bf16 and x_flat.dtype == jnp.float32:
        x_flat = x_flat.astype(jnp.bfloat16)
    itemsize = jnp.dtype(x_flat.dtype).itemsize
    out_itemsize = jnp.dtype(x.dtype).itemsize

    budget, vmem_limit = _vmem_budget_and_limit()
    tile = _choose_tile(cav, C, HW, itemsize, budget)
    grid = (pl.cdiv(HW, tile),)

    # Keep upcast x_j slices live across score+context passes only if they fit
    # comfortably in the 256 KiB vreg file; otherwise re-read from VMEM.
    keep_values = cav * C * tile * 4 <= 128 * 1024

    kernel = functools.partial(
        _fusion_kernel, cav=cav, C=C,
        inv_sqrt_dim=1.0 / math.sqrt(float(C)), keep_values=keep_values)

    cost = pl.CostEstimate(
        flops=(4 * cav * C + 8 * cav) * HW,
        transcendentals=(cav + 1) * HW,
        bytes_accessed=cav * C * HW * itemsize + C * HW * out_itemsize,
    )

    out_flat = pl.pallas_call(
        kernel,
        out_shape=jax.ShapeDtypeStruct((C, HW), x.dtype),
        grid=grid,
        in_specs=[pl.BlockSpec((cav * C, tile), lambda i: (0, i))],
        out_specs=pl.BlockSpec((C, tile), lambda i: (0, i)),
        compiler_params=pltpu.CompilerParams(
            dimension_semantics=("parallel",),
            vmem_limit_bytes=vmem_limit,
        ),
        cost_estimate=cost,
    )(x_flat)

    return out_flat.reshape(C, H, W)


def _reference(x):
    """Pure-JAX reference mirroring the PyTorch code path exactly."""
    cav, C, H, W = x.shape
    xr = x.reshape(cav, C, H * W).transpose(2, 0, 1)        # (HW, cav, C)
    score = jnp.einsum('pqc,pkc->pqk', xr, xr) / math.sqrt(C)
    attn = jax.nn.softmax(score, axis=-1)
    ctx = jnp.einsum('pqk,pkc->pqc', attn, xr)              # (HW, cav, C)
    out = ctx.transpose(1, 2, 0).reshape(cav, C, H, W)[0]
    return out


if __name__ == "__main__":
    key = jax.random.PRNGKey(0)
    cav_num, C, H, W = 2, 4, 16, 16
    x = jax.random.normal(key, (cav_num, C, H, W), dtype=jnp.float32)

    out = attention_fusion(x)
    out = jax.block_until_ready(out)

    ref = _reference(x)
    assert out.shape == (C, H, W), out.shape
    assert jnp.allclose(out, ref, atol=1e-5, rtol=1e-5), \
        float(jnp.max(jnp.abs(out - ref)))

    print("KERNEL_OK")
</pallas_src>

<mosaic_0001>
module attributes {stable_mosaic.version = 11 : i64} {
  func.func @_fusion_kernel(%arg0: i32, %arg1: memref<8x128xf32, #tpu.memory_space<vmem>>, %arg2: memref<4x128xf32, #tpu.memory_space<vmem>>) attributes {dimension_semantics = [#tpu.dimension_semantics<parallel>], iteration_bounds = array<i64: 2>, scalar_prefetch = 0 : i64, scratch_operands = 0 : i64, tpu.core_type = #tpu.core_type<tc>, window_params = [{transform_indices = @transform_0, window_bounds = array<i64: 8, 128>}, {transform_indices = @transform_1, window_bounds = array<i64: 4, 128>}]} {
    %c0 = arith.constant 0 : index
    %c0_0 = arith.constant 0 : index
    %0 = vector.load %arg1[%c0, %c0_0] : memref<8x128xf32, #tpu.memory_space<vmem>>, vector<4x128xf32>
    %1 = arith.mulf %0, %0 : vector<4x128xf32>
    %cst = arith.constant dense<0.000000e+00> : vector<128xf32>
    %2 = vector.multi_reduction <add>, %1, %cst [0] : vector<4x128xf32> to vector<128xf32>
    %3 = vector.shape_cast %2 : vector<128xf32> to vector<1x128xf32>
    %cst_1 = arith.constant 5.000000e-01 : f32
    %4 = vector.broadcast %cst_1 : f32 to vector<1x128xf32>
    %5 = arith.mulf %3, %4 : vector<1x128xf32>
    %c4 = arith.constant 4 : index
    %c0_2 = arith.constant 0 : index
    %6 = vector.load %arg1[%c4, %c0_2] : memref<8x128xf32, #tpu.memory_space<vmem>>, vector<4x128xf32>
    %7 = arith.mulf %0, %6 : vector<4x128xf32>
    %cst_3 = arith.constant dense<0.000000e+00> : vector<128xf32>
    %8 = vector.multi_reduction <add>, %7, %cst_3 [0] : vector<4x128xf32> to vector<128xf32>
    %9 = vector.shape_cast %8 : vector<128xf32> to vector<1x128xf32>
    %cst_4 = arith.constant 5.000000e-01 : f32
    %10 = vector.broadcast %cst_4 : f32 to vector<1x128xf32>
    %11 = arith.mulf %9, %10 : vector<1x128xf32>
    %12 = tpu.concatenate %5, %11 in 0 : vector<1x128xf32>, vector<1x128xf32> -> vector<2x128xf32>
    %cst_5 = arith.constant dense<0xFF800000> : vector<128xf32>
    %13 = vector.multi_reduction <maximumf>, %12, %cst_5 [0] : vector<2x128xf32> to vector<128xf32>
    %14 = vector.shape_cast %13 : vector<128xf32> to vector<1x128xf32>
    %15 = vector.broadcast %14 : vector<1x128xf32> to vector<2x128xf32>
    %16 = arith.subf %12, %15 : vector<2x128xf32>
    %17 = math.exp %16 : vector<2x128xf32>
    %cst_6 = arith.constant dense<0.000000e+00> : vector<128xf32>
    %18 = vector.multi_reduction <add>, %17, %cst_6 [0] : vector<2x128xf32> to vector<128xf32>
    %19 = vector.shape_cast %18 : vector<128xf32> to vector<1x128xf32>
    %20 = tpu.reciprocal %19 {approx = true} : vector<1x128xf32> -> vector<1x128xf32>
    %21 = arith.mulf %19, %20 : vector<1x128xf32>
    %cst_7 = arith.constant 2.000000e+00 : f32
    %22 = vector.broadcast %cst_7 : f32 to vector<1x128xf32>
    %23 = arith.subf %22, %21 : vector<1x128xf32>
    %24 = arith.mulf %20, %23 : vector<1x128xf32>
    %25 = vector.broadcast %24 : vector<1x128xf32> to vector<2x128xf32>
    %26 = arith.mulf %17, %25 : vector<2x128xf32>
    %27 = vector.extract_strided_slice %26 {offsets = [0, 0], sizes = [1, 128], strides = [1, 1]} : vector<2x128xf32> to vector<1x128xf32>
    %28 = vector.broadcast %27 : vector<1x128xf32> to vector<4x128xf32>
    %29 = arith.mulf %28, %0 : vector<4x128xf32>
    %30 = vector.extract_strided_slice %26 {offsets = [1, 0], sizes = [1, 128], strides = [1, 1]} : vector<2x128xf32> to vector<1x128xf32>
    %31 = vector.broadcast %30 : vector<1x128xf32> to vector<4x128xf32>
    %32 = arith.mulf %31, %6 : vector<4x128xf32>
    %33 = arith.addf %29, %32 : vector<4x128xf32>
    %c0_8 = arith.constant 0 : index
    %c0_9 = arith.constant 0 : index
    %34 = vector.load %arg2[%c0_8, %c0_9] : memref<4x128xf32, #tpu.memory_space<vmem>>, vector<4x128xf32>
    tpu.vector_store %arg2[%c0_8, %c0_9], %33 {strides = array<i32>} : memref<4x128xf32, #tpu.memory_space<vmem>>, vector<4x128xf32>,
    return
  }
  func.func @transform_0(%arg0: i32) -> (i32, i32) {
    %c0_i32 = arith.constant 0 : i32
    %c0_i32_0 = arith.constant 0 : i32
    return %c0_i32, %arg0 : i32, i32
  }
  func.func @transform_1(%arg0: i32) -> (i32, i32) {
    %c0_i32 = arith.constant 0 : i32
    %c0_i32_0 = arith.constant 0 : i32
    return %c0_i32, %arg0 : i32, i32
  }
}

</mosaic_0001>

<llo_original>
// kernel: tpu_custom_call.1
$region0: #{tpu_custom_call.1}
  #allocation0 [shape = 'u32[]', space=smem, size = 0x4, offset = 0x4, fixed_abs, tag = 'smem constant byte address 0x4 - core index']
  #allocation1 [shape = 'u32[144,128]{1,0:T(1,128)}', space=vmem, size = 0x12000, scoped, tag = 'internal scratch']
  %s0 = inlined_call_operand.hbm [shape: f32[8,256], index: 0, kind: input, shape index: {}]
  %s1 = inlined_call_operand.hbm [shape: f32[4,256], index: 1, kind: output, shape index: {}]
  %s2 = sld [smem:[#allocation0]]
  $region41: #{tpu_custom_call.1} parent=0
    _
  %s4 = ssub.s32 1, %s2
  %s5 = scalar_select 0, %s4, %s2
  $region1: #{tpu_custom_call.1} parent=0
    #allocation2 [shape = 'u8[8192]{0}', space=vmem, size = 0x2000, scoped, tag = 'input window, operand 0']
    #allocation3 [shape = 's32[2]{0}', space=sflag, size = 0x8, scoped, tag = 'scoped memory for tpu_custom_call.1']
    #allocation4 [shape = 's32[2]{0}', space=sflag, size = 0x8, scoped, tag = 'scoped memory for tpu_custom_call.1']
    #allocation5 [shape = 'u8[4096]{0}', space=vmem, size = 0x1000, scoped, tag = 'output window, operand 0']
    %6 = vsyncpa [#allocation3], 0
    %s7 = scalar_lea.sflag [#allocation3], 1
    %8 = vsyncpa %s7, 0
    %9 = vsyncpa [#allocation4], 0
    %s10 = scalar_lea.sflag [#allocation4], 1
    %11 = vsyncpa %s10, 0
    loop: start=0, step=1, limit=4
    $region2: #{tpu_custom_call.1} parent=1 // loop_pre_header
      _
    $region3: #{tpu_custom_call.1} parent=1 // loop_header
      %s13 = sphi 0, %s17
      %p14 = scmp.ge.s32.totalorder %s13, 4
      %s23 = sphi 0, %s25
      %s26 = sphi 0, %s23
      %s27 = sphi 0, %s26
      %s43 = sphi 0, %s27
      %s49 = sphi 0, %s51
      %s52 = sphi 0, %s49
      %s53 = sphi 0, %s52
      %s69 = sphi 0, %s53
    $region4: #{tpu_custom_call.1} parent=1 // loop_header_branch
      %16 = sbr.rel (%p14) target = $region8
    $region5: #{tpu_custom_call.1} parent=1 // loop_body
      %s18 = ssub.s32 %s13, 1
      %s19 = ssub.s32 %s13, 2
      %s20 = sadd.s32 %s13, 1
      %s21 = ssub.s32 %s13, %s20
      %p22 = scmp.eq.s32.totalorder %s21, 0
      %s24 = sadd.s32 %s23, 1
      %s25 = scalar_select %p22, %s23, %s24
      %p28 = pneg %p22
      %p29 = scmp.eq.s32.totalorder %s13, 1
      %p30 = por %p28, %p29
      %p31 = scmp.ne.s32.totalorder %s23, %s26
      %p32 = scmp.eq.s32.totalorder %s13, 0
      %p33 = por %p31, %p32
      %p34 = scmp.ne.s32.totalorder %s23, %s26
      %p35 = scmp.eq.s32.totalorder %s18, 1
      %p36 = por %p34, %p35
      %p37 = scmp.ne.s32.totalorder %s26, %s27
      %p38 = scmp.eq.s32.totalorder %s18, 0
      %p39 = por %p37, %p38
      %p40 = scmp.ne.s32.totalorder %s26, %s27
      %p41 = scmp.eq.s32.totalorder %s19, 1
      %p42 = por %p40, %p41
      %p44 = scmp.ne.s32.totalorder %s27, %s43
      %p45 = scmp.eq.s32.totalorder %s19, 0
      %p46 = por %p44, %p45
      %s47 = ssub.s32 %s13, %s20
      %p48 = scmp.eq.s32.totalorder %s47, 0
      %s50 = sadd.s32 %s49, 1
      %s51 = scalar_select %p48, %s49, %s50
      %p54 = pneg %p48
      %p55 = scmp.eq.s32.totalorder %s13, 1
      %p56 = por %p54, %p55
      %p57 = scmp.ne.s32.totalorder %s49, %s52
      %p58 = scmp.eq.s32.totalorder %s13, 0
      %p59 = por %p57, %p58
      %p60 = scmp.ne.s32.totalorder %s49, %s52
      %p61 = scmp.eq.s32.totalorder %s18, 1
      %p62 = por %p60, %p61
      %p63 = scmp.ne.s32.totalorder %s52, %s53
      %p64 = scmp.eq.s32.totalorder %s18, 0
      %p65 = por %p63, %p64
      %p66 = scmp.ne.s32.totalorder %s52, %s53
      %p67 = scmp.eq.s32.totalorder %s19, 1
      %p68 = por %p66, %p67
      %p70 = scmp.ne.s32.totalorder %s53, %s69
      %p71 = scmp.eq.s32.totalorder %s19, 0
      %p72 = por %p70, %p71
      %p73 = scmp.le.s32.totalorder 1, %s13
      %p74 = scmp.lt.s32.totalorder %s13, 3
      %p75 = pnand %p73, %p74
      %p76 = pneg %p75
      // Predicated region
      $region9: #{tpu_custom_call.1} parent=5 // pred_check
        _
      $region10: #{tpu_custom_call.1} parent=5 // pred_check_branch
        %78 = sbr.rel (%p75) target = $region12
      $region11: #{tpu_custom_call.1} parent=5 // pred_region
        %s79 = ssub.s32 %s13, 1
      $region12: #{tpu_custom_call.1} parent=5 // pred_fallthru
        _
      %p80 = scmp.lt.s32.totalorder %s13, 2
      // Predicated region
      $region13: #{tpu_custom_call.1} parent=5 // pred_check
        %p81 = pneg %p80
      $region14: #{tpu_custom_call.1} parent=5 // pred_check_branch
        %83 = sbr.rel (%p81) target = $region16
      $region15: #{tpu_custom_call.1} parent=5 // pred_region
        // Predicated region
        $region17: #{tpu_custom_call.1} parent=15 // pred_check
          %p84 = pneg %p33
        $region18: #{tpu_custom_call.1} parent=15 // pred_check_branch
          %86 = sbr.rel (%p84) target = $region20
        $region19: #{tpu_custom_call.1} parent=15 // pred_region
          %s87 = sand.u32 %s23, 1
          %s88 = scalar_lea.sflag [#allocation3], %s87
          %s89 = sand.u32 %s23, 1
          %s90 = smul.addr %s89, 8
          %s91 = scalar_lea.vmem [#allocation2], %s90
          %s93 = ssub.s32 128, 128
          %94 = vsyncadd %s88, %s93
          %s95 = smul.addr %s13, 128
          %s96 = scalar_lea.hbm %s0, %s95
          %s98 = sshll.u32 %s91, 4
          %s99 = int_to_ptr.vmem [resolvable:$true] %s98
          %101 = dma.hbm_to_vmem [thread:$0]  %s96, 128, %s99, %s88
        $region20: #{tpu_custom_call.1} parent=15 // pred_fallthru
          _
      $region16: #{tpu_custom_call.1} parent=5 // pred_fallthru
        _
      %p102 = scmp.le.s32.totalorder 1, %s13
      %p103 = scmp.lt.s32.totalorder %s13, 3
      %p104 = pnand %p102, %p103
      %p105 = pneg %p104
      // Predicated region
      $region21: #{tpu_custom_call.1} parent=5 // pred_check
        _
      $region22: #{tpu_custom_call.1} parent=5 // pred_check_branch
        %107 = sbr.rel (%p104) target = $region24
      $region23: #{tpu_custom_call.1} parent=5 // pred_region
        %s108 = ssub.s32 %s13, 1
        %s109 = sand.u32 %s26, 1
        %s110 = scalar_lea.sflag [#allocation3], %s109
        %s111 = sand.u32 %s26, 1
        %s112 = smul.addr %s111, 8
        %s113 = scalar_lea.vmem [#allocation2], %s112
        // Predicated region
        $region25: #{tpu_custom_call.1} parent=23 // pred_check
          %p114 = pneg %p39
        $region26: #{tpu_custom_call.1} parent=23 // pred_check_branch
          %116 = sbr.rel (%p114) target = $region28
        $region27: #{tpu_custom_call.1} parent=23 // pred_region
          %117 = dma.done %s110, 128
        $region28: #{tpu_custom_call.1} parent=23 // pred_fallthru
          _
        %s118 = sand.u32 %s26, 1
        %s119 = scalar_lea.sflag [#allocation3], %s118
        %s120 = sand.u32 %s26, 1
        %s121 = smul.addr %s120, 8
        %s122 = scalar_lea.vmem [#allocation2], %s121
        %p123 = pneg %p39
        %p124 = pneg %p36
        %p125 = pneg %p65
        %p126 = pneg %p62
        %s127 = sand.u32 %s52, 1
        %s128 = scalar_lea.sflag [#allocation4], %s127
        %s129 = sand.u32 %s52, 1
        %s130 = smul.addr %s129, 4
        %s131 = scalar_lea.vmem [#allocation5], %s130
        %v132 = vld [vmem:[%s113] sm:$0xf]
        %v133 = vmul.f32 %v132, %v132
        %vm134 = vcmask 1043456
        %v135 = vsel %vm134, %v133, 0.0
        %v136 = vrot.slane %v135, 4
        %v137 = vadd.f32 %v135, %v136
        %v138 = vrot.slane %v137, 2
        %v139 = vadd.f32 %v137, %v138
        %v140 = vrot.slane %v139, 1
        %v141 = vadd.f32 %v139, %v140
        %v142 = vmul.f32 %v141, 0.5
        %v143 = vld [vmem:[%s113 + $0x4] sm:$0xf]
        %v144 = vmul.f32 %v132, %v143
        %v145 = vsel %vm134, %v144, 0.0
        %v146 = vrot.slane %v145, 4
        %v147 = vadd.f32 %v145, %v146
        %v148 = vrot.slane %v147, 2
        %v149 = vadd.f32 %v147, %v148
        %v150 = vrot.slane %v149, 1
        %v151 = vadd.f32 %v149, %v150
        %v152 = vmul.f32 %v151, 0.5
        %vm153 = vcmask 1040384
        %v154 = vsel %vm153, %v142, %v152
        %vm155 = vcmask 1041408
        %v156 = vsel %vm155, %v154, -inf
        %v157 = vrot.slane %v156, 4
        %v158 = vmax.f32 %v156, %v157
        %v159 = vrot.slane %v158, 2
        %v160 = vmax.f32 %v158, %v159
        %v161 = vrot.slane %v160, 1
        %v162 = vmax.f32 %v160, %v161
        %v163 = vsub.f32 %v154, %v162
        %v164 = vmul.f32 %v163, 1.442695
        %v165 = vpow.pop %v164
        %v166 = vsel %vm155, %v165, 0.0
        %v167 = vrot.slane %v166, 4
        %v168 = vadd.f32 %v166, %v167
        %v169 = vrot.slane %v168, 2
        %v170 = vadd.f32 %v168, %v169
        %v171 = vrot.slane %v170, 1
        %v172 = vadd.f32 %v170, %v171
        %v173 = vrcp.pop %v172
        %v174 = vmul.f32 %v172, %v173
        %v175 = vsub.f32 2.0, %v174
        %v176 = vmul.f32 %v173, %v175
        %v177 = vmul.f32 %v165, %v176
        %v178 = vlaneseq
        %v179 = vshrl.u32 %v178, 7
        %v180 = vsub.s32 0, %v179
        %v181 = vrot.slane %v177, %v180
        %v182 = vmul.f32 %v181, %v132
        %v183 = vlaneseq
        %v184 = vshrl.u32 %v183, 7
        %v185 = vsub.s32 1, %v184
        %v186 = vrot.slane %v177, %v185
        %v187 = vmul.f32 %v186, %v143
        %v188 = vadd.f32 %v182, %v187
        %189 = vst [vmem:[%s131] sm:$0xf] %v188
        %s190 = sand.u32 %s52, 1
        %s191 = scalar_lea.sflag [#allocation4], %s190
        %s192 = sand.u32 %s52, 1
        %s193 = smul.addr %s192, 4
        %s194 = scalar_lea.vmem [#allocation5], %s193
        // Predicated region
        $region29: #{tpu_custom_call.1} parent=23 // pred_check
          %p195 = pneg %p62
        $region30: #{tpu_custom_call.1} parent=23 // pred_check_branch
          %197 = sbr.rel (%p195) target = $region32
        $region31: #{tpu_custom_call.1} parent=23 // pred_region
          %s199 = ssub.s32 64, 64
          %200 = vsyncadd %s191, %s199
          %s201 = smul.addr %s18, 64
          %s202 = scalar_lea.hbm %s1, %s201
          %s204 = sshll.u32 %s194, 4
          %s205 = int_to_ptr.vmem [resolvable:$true] %s204
          %207 = dma.vmem_to_hbm [thread:$0]  %s205, 64, %s202, %s191
        $region32: #{tpu_custom_call.1} parent=23 // pred_fallthru
          _
      $region24: #{tpu_custom_call.1} parent=5 // pred_fallthru
        _
      %p208 = scmp.le.s32.totalorder 2, %s13
      // Predicated region
      $region33: #{tpu_custom_call.1} parent=5 // pred_check
        %p209 = pneg %p208
      $region34: #{tpu_custom_call.1} parent=5 // pred_check_branch
        %211 = sbr.rel (%p209) target = $region36
      $region35: #{tpu_custom_call.1} parent=5 // pred_region
        %s212 = ssub.s32 %s13, 2
        // Predicated region
        $region37: #{tpu_custom_call.1} parent=35 // pred_check
          %p213 = pneg %p68
        $region38: #{tpu_custom_call.1} parent=35 // pred_check_branch
          %215 = sbr.rel (%p213) target = $region40
        $region39: #{tpu_custom_call.1} parent=35 // pred_region
          %s216 = sand.u32 %s53, 1
          %s217 = scalar_lea.sflag [#allocation4], %s216
          %s218 = sand.u32 %s53, 1
          %s219 = smul.addr %s218, 4
          %s220 = scalar_lea.vmem [#allocation5], %s219
          %221 = dma.done %s217, 64
        $region40: #{tpu_custom_call.1} parent=35 // pred_fallthru
          _
      $region36: #{tpu_custom_call.1} parent=5 // pred_fallthru
        _
    $region6: #{tpu_custom_call.1} parent=1 // loop_footer
      %s17 = sadd.s32 1, %s13
    $region7: #{tpu_custom_call.1} parent=1 // loop_footer_branch
      %12 = sbr.rel target = $region3
    $region8: #{tpu_custom_call.1} parent=1 // loop_exit
      _
    %222 = vsyncpa [#allocation3], 1
    %s223 = scalar_lea.sflag [#allocation3], 1
    %224 = vsyncpa %s223, 1
    %225 = vsyncpa [#allocation4], 1
    %s226 = scalar_lea.sflag [#allocation4], 1
    %227 = vsyncpa %s226, 1

</llo_original>
